<compile_context>
chip_gen: v7x
topology: tpu7x:2x2x1
jax: 0.10.0
libtpu: 0.0.40
codegen_flags: <defaults>
</compile_context>

<pallas_src>
import jax
import jax.numpy as jnp
from jax import lax
from jax.experimental import pallas as pl
from jax.experimental.pallas import tpu as pltpu


def rnn_kernel(ids_ref, m_ref, whh_ref, bh_ref, wfc_ref, bfc_ref, out_ref):
    # ids_ref: (T*Bp, 1) int32 token ids, time-major (row t*Bp + b == x[b, t])
    # m_ref:   (V, H)    bf16 fused embedding + input projection (emb @ W_ih^T)
    # whh_ref: (H, H)    bf16 W_hh^T
    # bh_ref:  (1, H)    f32 b_ih + b_hh (folded)
    # wfc_ref: (H, Op)   bf16 W_fc^T zero-padded to lane-dense output width
    # bfc_ref: (1, Op)   f32 b_fc zero-padded
    # out_ref: (Bp, Op)  f32
    TB = ids_ref.shape[0]
    V = m_ref.shape[0]
    Bp = out_ref.shape[0]            # sublane-padded batch (multiple of 8)
    T = TB // Bp
    H = whh_ref.shape[0]

    # 2-D one-hot built directly from (T*Bp, 1) ids vs a lane iota over V.
    # TODO(synk): for a non-toy vocab, replace the one-hot matmul with a
    # gather of rows of M (scalar-prefetched ids + per-row dynamic slice);
    # at V=32 the one-hot path is negligible and keeps a single MXU pass.
    ids = ids_ref[...]                                           # (T*Bp, 1)
    iota_v = lax.broadcasted_iota(jnp.int32, (TB, V), 1)         # (T*Bp, V)
    onehot = (ids == iota_v).astype(jnp.bfloat16)                # (T*Bp, V)

    # Single fused MXU matmul: embedding lookup + input projection for ALL
    # timesteps (bf16 operands, f32 accumulate), folded bias added once.
    xw = (jnp.dot(onehot, m_ref[...], preferred_element_type=jnp.float32)
          + bh_ref[...])                                         # (T*Bp, H) f32

    whh = whh_ref[...]                                           # (H, H) bf16, loaded once

    # Recurrence: h_t = tanh(x_t W_ih^T + b + h_{t-1} W_hh^T), h_0 = 0.
    # h stays vreg-resident in f32; each 8-row xw slice is sublane-aligned.
    # NOTE: holding W_hh resident in the MXU (matmul_push_rhs / matmul_acc_lhs
    # / matmul_pop) would drop the per-step weight push, but accumulator
    # reset semantics differ between MRF (v5e/v6e) and MRB (v7x); a plain
    # jnp.dot with a loop-invariant bf16 RHS is kept for portability.
    h = jnp.zeros((Bp, H), jnp.float32)
    for t in range(T):   # T is small & static; use lax.fori_loop for large T
        h = jnp.tanh(xw[t * Bp:(t + 1) * Bp, :]
                     + jnp.dot(h.astype(jnp.bfloat16), whh,
                               preferred_element_type=jnp.float32))

    # fc on the last hidden state; lane-dense, sublane-aligned unmasked store.
    out_ref[...] = (jnp.dot(h.astype(jnp.bfloat16), wfc_ref[...],
                            preferred_element_type=jnp.float32)
                    + bfc_ref[...])


def rnn_forward(x_ids, emb_table, w_ih_t, w_hh_t, b_h, w_fc_t, b_fc,
                padding_idx=0):
    B, T = x_ids.shape
    V, E = emb_table.shape
    H = w_hh_t.shape[0]
    O = w_fc_t.shape[1]
    B_pad = max(8, pl.cdiv(B, 8) * 8)            # full sublane tile
    O_pad = max(128, pl.cdiv(O, 128) * 128)      # lane-dense output width

    # Fuse embedding + input projection.  emb_table[padding_idx] == 0 keeps
    # the padding row of M zero, preserving nn.Embedding padding semantics.
    m = jnp.dot(emb_table, w_ih_t).astype(jnp.bfloat16)          # (V, H)
    whh_bf = w_hh_t.astype(jnp.bfloat16)                         # (H, H)

    # Zero-pad fc weight/bias so the kernel output is lane-dense.
    w_fc_p = jnp.zeros((H, O_pad), jnp.bfloat16).at[:, :O].set(
        w_fc_t.astype(jnp.bfloat16))
    b_fc_p = jnp.zeros((1, O_pad), jnp.float32).at[:, :O].set(b_fc)

    # Pad batch to B_pad with padding_idx tokens (zero row of M -> bounded,
    # deterministic throwaway rows), then time-major flatten:
    # row t*B_pad + b == x[b, t].
    ids_pad = jnp.full((B_pad, T), padding_idx, jnp.int32).at[:B, :].set(
        x_ids.astype(jnp.int32))
    ids_tb = jnp.transpose(ids_pad).reshape(T * B_pad, 1)

    flops = (2 * (T * B_pad) * V * H          # fused one-hot matmul
             + 2 * T * B_pad * H * H          # recurrence
             + 2 * B_pad * H * O_pad)         # fc
    transcendentals = T * B_pad * H           # tanh
    bytes_accessed = (ids_tb.size * 4 + m.size * 2 + whh_bf.size * 2
                      + b_h.size * 4 + w_fc_p.size * 2 + b_fc_p.size * 4
                      + B_pad * O_pad * 4)

    vmem = pl.BlockSpec(memory_space=pltpu.MemorySpace.VMEM)
    out_pad = pl.pallas_call(
        rnn_kernel,
        out_shape=jax.ShapeDtypeStruct((B_pad, O_pad), jnp.float32),
        in_specs=[vmem] * 6,
        out_specs=vmem,
        cost_estimate=pl.CostEstimate(flops=flops,
                                      transcendentals=transcendentals,
                                      bytes_accessed=bytes_accessed),
    )(ids_tb, m, whh_bf, b_h, w_fc_p, b_fc_p)

    return out_pad[:B, :O]


def rnn_reference(x_ids, emb_table, w_ih_t, w_hh_t, b_h, w_fc_t, b_fc):
    """Pure-JAX f32 reference mirroring the PyTorch forward."""
    B, T = x_ids.shape
    H = w_hh_t.shape[0]
    emb = emb_table[x_ids]                                      # (B, T, E)
    h = jnp.zeros((B, H), jnp.float32)
    for t in range(T):
        h = jnp.tanh(emb[:, t, :] @ w_ih_t + h @ w_hh_t + b_h)
    return h @ w_fc_t + b_fc


if __name__ == "__main__":
    # Small, deterministic configuration consistent with RNN.__init__.
    vocab_size = 32
    emb_size = 16
    padding_idx = 0
    output_size = 4
    hidden_size = 32
    batch = 2
    seq = 8

    key = jax.random.PRNGKey(0)
    k_emb, k_wih, k_whh, k_bih, k_bhh, k_wfc, k_bfc, k_x = jax.random.split(key, 8)

    emb_table = jax.random.normal(k_emb, (vocab_size, emb_size), jnp.float32) * 0.1
    # nn.Embedding zeros the padding_idx row.
    emb_table = emb_table.at[padding_idx].set(0.0)

    w_ih = jax.random.normal(k_wih, (hidden_size, emb_size), jnp.float32) * 0.1
    w_hh = jax.random.normal(k_whh, (hidden_size, hidden_size), jnp.float32) * 0.1
    b_ih = jax.random.normal(k_bih, (hidden_size,), jnp.float32) * 0.1
    b_hh = jax.random.normal(k_bhh, (hidden_size,), jnp.float32) * 0.1
    w_fc = jax.random.normal(k_wfc, (output_size, hidden_size), jnp.float32) * 0.1
    b_fc = jax.random.normal(k_bfc, (output_size,), jnp.float32) * 0.1

    # Pre-transpose weights to (in, out); fold the two RNN biases together.
    w_ih_t = jnp.transpose(w_ih)                       # (E, H)
    w_hh_t = jnp.transpose(w_hh)                       # (H, H)
    b_h = (b_ih + b_hh).reshape(1, hidden_size)        # (1, H)
    w_fc_t = jnp.transpose(w_fc)                       # (H, O)
    b_fc2 = b_fc.reshape(1, output_size)               # (1, O)

    # Token ids, include some padding_idx tokens to exercise the zeroed row.
    x_ids = jax.random.randint(k_x, (batch, seq), 0, vocab_size, jnp.int32)
    x_ids = x_ids.at[:, -1].set(padding_idx)

    out = rnn_forward(x_ids, emb_table, w_ih_t, w_hh_t, b_h, w_fc_t, b_fc2,
                      padding_idx=padding_idx)
    out = jax.block_until_ready(out)

    ref = rnn_reference(x_ids, emb_table, w_ih_t, w_hh_t, b_h, w_fc_t, b_fc2)
    assert out.shape == (batch, output_size)
    # Tolerance accounts for bf16 MXU operands (f32 accumulation) in the
    # kernel vs. the full-f32 reference; observed error is ~1e-3.
    assert jnp.allclose(out, ref, rtol=2e-2, atol=2e-2), (out, ref)

    # TODO(synk): PyTorch raises on out-of-range token ids; the one-hot path
    # silently yields a zero embedding instead.

    print("KERNEL_OK")
</pallas_src>

<mosaic_0001>
module attributes {stable_mosaic.version = 11 : i64} {
  func.func @rnn_kernel(%arg0: memref<64x1xi32, #tpu.memory_space<vmem>>, %arg1: memref<32x32xbf16, #tpu.memory_space<vmem>>, %arg2: memref<32x32xbf16, #tpu.memory_space<vmem>>, %arg3: memref<1x32xf32, #tpu.memory_space<vmem>>, %arg4: memref<32x128xbf16, #tpu.memory_space<vmem>>, %arg5: memref<1x128xf32, #tpu.memory_space<vmem>>, %arg6: memref<8x128xf32, #tpu.memory_space<vmem>>) attributes {dimension_semantics = [], scalar_prefetch = 0 : i64, scratch_operands = 0 : i64, tpu.core_type = #tpu.core_type<tc>} {
    %c0 = arith.constant 0 : index
    %c0_0 = arith.constant 0 : index
    %0 = vector.load %arg0[%c0, %c0_0] : memref<64x1xi32, #tpu.memory_space<vmem>>, vector<64x1xi32>
    %1 = tpu.iota {dimensions = array<i32: 1>} : vector<64x32xi32>
    %2 = vector.broadcast %0 : vector<64x1xi32> to vector<64x32xi32>
    %3 = arith.cmpi eq, %2, %1 : vector<64x32xi32>
    %4 = arith.extui %3 : vector<64x32xi1> to vector<64x32xi32>
    %5 = arith.sitofp %4 : vector<64x32xi32> to vector<64x32xf32>
    %6 = arith.truncf %5 : vector<64x32xf32> to vector<64x32xbf16>
    %c0_1 = arith.constant 0 : index
    %c0_2 = arith.constant 0 : index
    %7 = vector.load %arg1[%c0_1, %c0_2] : memref<32x32xbf16, #tpu.memory_space<vmem>>, vector<32x32xbf16>
    %cst = arith.constant dense<0.000000e+00> : vector<64x32xf32>
    %8 = tpu.matmul %6, %7, %cst {dimension_numbers = #tpu.dot_dimension_numbers<[1], [0], [0], [1], [0, 0, 1, 1], [], []>} : vector<64x32xbf16>, vector<32x32xbf16>, vector<64x32xf32> -> vector<64x32xf32>
    %c0_3 = arith.constant 0 : index
    %c0_4 = arith.constant 0 : index
    %9 = vector.load %arg3[%c0_3, %c0_4] : memref<1x32xf32, #tpu.memory_space<vmem>>, vector<1x32xf32>
    %10 = vector.broadcast %9 : vector<1x32xf32> to vector<64x32xf32>
    %11 = arith.addf %8, %10 : vector<64x32xf32>
    %c0_5 = arith.constant 0 : index
    %c0_6 = arith.constant 0 : index
    %12 = vector.load %arg2[%c0_5, %c0_6] : memref<32x32xbf16, #tpu.memory_space<vmem>>, vector<32x32xbf16>
    %cst_7 = arith.constant 0.000000e+00 : f32
    %13 = vector.broadcast %cst_7 : f32 to vector<8x32xf32>
    %14 = vector.extract_strided_slice %11 {offsets = [0, 0], sizes = [8, 32], strides = [1, 1]} : vector<64x32xf32> to vector<8x32xf32>
    %15 = arith.truncf %13 : vector<8x32xf32> to vector<8x32xbf16>
    %cst_8 = arith.constant dense<0.000000e+00> : vector<8x32xf32>
    %16 = tpu.matmul %15, %12, %cst_8 {dimension_numbers = #tpu.dot_dimension_numbers<[1], [0], [0], [1], [0, 0, 1, 1], [], []>} : vector<8x32xbf16>, vector<32x32xbf16>, vector<8x32xf32> -> vector<8x32xf32>
    %17 = arith.addf %14, %16 : vector<8x32xf32>
    %18 = math.tanh %17 : vector<8x32xf32>
    %19 = vector.extract_strided_slice %11 {offsets = [8, 0], sizes = [8, 32], strides = [1, 1]} : vector<64x32xf32> to vector<8x32xf32>
    %20 = arith.truncf %18 : vector<8x32xf32> to vector<8x32xbf16>
    %cst_9 = arith.constant dense<0.000000e+00> : vector<8x32xf32>
    %21 = tpu.matmul %20, %12, %cst_9 {dimension_numbers = #tpu.dot_dimension_numbers<[1], [0], [0], [1], [0, 0, 1, 1], [], []>} : vector<8x32xbf16>, vector<32x32xbf16>, vector<8x32xf32> -> vector<8x32xf32>
    %22 = arith.addf %19, %21 : vector<8x32xf32>
    %23 = math.tanh %22 : vector<8x32xf32>
    %24 = vector.extract_strided_slice %11 {offsets = [16, 0], sizes = [8, 32], strides = [1, 1]} : vector<64x32xf32> to vector<8x32xf32>
    %25 = arith.truncf %23 : vector<8x32xf32> to vector<8x32xbf16>
    %cst_10 = arith.constant dense<0.000000e+00> : vector<8x32xf32>
    %26 = tpu.matmul %25, %12, %cst_10 {dimension_numbers = #tpu.dot_dimension_numbers<[1], [0], [0], [1], [0, 0, 1, 1], [], []>} : vector<8x32xbf16>, vector<32x32xbf16>, vector<8x32xf32> -> vector<8x32xf32>
    %27 = arith.addf %24, %26 : vector<8x32xf32>
    %28 = math.tanh %27 : vector<8x32xf32>
    %29 = vector.extract_strided_slice %11 {offsets = [24, 0], sizes = [8, 32], strides = [1, 1]} : vector<64x32xf32> to vector<8x32xf32>
    %30 = arith.truncf %28 : vector<8x32xf32> to vector<8x32xbf16>
    %cst_11 = arith.constant dense<0.000000e+00> : vector<8x32xf32>
    %31 = tpu.matmul %30, %12, %cst_11 {dimension_numbers = #tpu.dot_dimension_numbers<[1], [0], [0], [1], [0, 0, 1, 1], [], []>} : vector<8x32xbf16>, vector<32x32xbf16>, vector<8x32xf32> -> vector<8x32xf32>
    %32 = arith.addf %29, %31 : vector<8x32xf32>
    %33 = math.tanh %32 : vector<8x32xf32>
    %34 = vector.extract_strided_slice %11 {offsets = [32, 0], sizes = [8, 32], strides = [1, 1]} : vector<64x32xf32> to vector<8x32xf32>
    %35 = arith.truncf %33 : vector<8x32xf32> to vector<8x32xbf16>
    %cst_12 = arith.constant dense<0.000000e+00> : vector<8x32xf32>
    %36 = tpu.matmul %35, %12, %cst_12 {dimension_numbers = #tpu.dot_dimension_numbers<[1], [0], [0], [1], [0, 0, 1, 1], [], []>} : vector<8x32xbf16>, vector<32x32xbf16>, vector<8x32xf32> -> vector<8x32xf32>
    %37 = arith.addf %34, %36 : vector<8x32xf32>
    %38 = math.tanh %37 : vector<8x32xf32>
    %39 = vector.extract_strided_slice %11 {offsets = [40, 0], sizes = [8, 32], strides = [1, 1]} : vector<64x32xf32> to vector<8x32xf32>
    %40 = arith.truncf %38 : vector<8x32xf32> to vector<8x32xbf16>
    %cst_13 = arith.constant dense<0.000000e+00> : vector<8x32xf32>
    %41 = tpu.matmul %40, %12, %cst_13 {dimension_numbers = #tpu.dot_dimension_numbers<[1], [0], [0], [1], [0, 0, 1, 1], [], []>} : vector<8x32xbf16>, vector<32x32xbf16>, vector<8x32xf32> -> vector<8x32xf32>
    %42 = arith.addf %39, %41 : vector<8x32xf32>
    %43 = math.tanh %42 : vector<8x32xf32>
    %44 = vector.extract_strided_slice %11 {offsets = [48, 0], sizes = [8, 32], strides = [1, 1]} : vector<64x32xf32> to vector<8x32xf32>
    %45 = arith.truncf %43 : vector<8x32xf32> to vector<8x32xbf16>
    %cst_14 = arith.constant dense<0.000000e+00> : vector<8x32xf32>
    %46 = tpu.matmul %45, %12, %cst_14 {dimension_numbers = #tpu.dot_dimension_numbers<[1], [0], [0], [1], [0, 0, 1, 1], [], []>} : vector<8x32xbf16>, vector<32x32xbf16>, vector<8x32xf32> -> vector<8x32xf32>
    %47 = arith.addf %44, %46 : vector<8x32xf32>
    %48 = math.tanh %47 : vector<8x32xf32>
    %49 = vector.extract_strided_slice %11 {offsets = [56, 0], sizes = [8, 32], strides = [1, 1]} : vector<64x32xf32> to vector<8x32xf32>
    %50 = arith.truncf %48 : vector<8x32xf32> to vector<8x32xbf16>
    %cst_15 = arith.constant dense<0.000000e+00> : vector<8x32xf32>
    %51 = tpu.matmul %50, %12, %cst_15 {dimension_numbers = #tpu.dot_dimension_numbers<[1], [0], [0], [1], [0, 0, 1, 1], [], []>} : vector<8x32xbf16>, vector<32x32xbf16>, vector<8x32xf32> -> vector<8x32xf32>
    %52 = arith.addf %49, %51 : vector<8x32xf32>
    %53 = math.tanh %52 : vector<8x32xf32>
    %54 = arith.truncf %53 : vector<8x32xf32> to vector<8x32xbf16>
    %c0_16 = arith.constant 0 : index
    %c0_17 = arith.constant 0 : index
    %55 = vector.load %arg4[%c0_16, %c0_17] : memref<32x128xbf16, #tpu.memory_space<vmem>>, vector<32x128xbf16>
    %cst_18 = arith.constant dense<0.000000e+00> : vector<8x128xf32>
    %56 = tpu.matmul %54, %55, %cst_18 {dimension_numbers = #tpu.dot_dimension_numbers<[1], [0], [0], [1], [0, 0, 1, 1], [], []>} : vector<8x32xbf16>, vector<32x128xbf16>, vector<8x128xf32> -> vector<8x128xf32>
    %c0_19 = arith.constant 0 : index
    %c0_20 = arith.constant 0 : index
    %57 = vector.load %arg5[%c0_19, %c0_20] : memref<1x128xf32, #tpu.memory_space<vmem>>, vector<1x128xf32>
    %58 = vector.broadcast %57 : vector<1x128xf32> to vector<8x128xf32>
    %59 = arith.addf %56, %58 : vector<8x128xf32>
    %c0_21 = arith.constant 0 : index
    %c0_22 = arith.constant 0 : index
    %60 = vector.load %arg6[%c0_21, %c0_22] : memref<8x128xf32, #tpu.memory_space<vmem>>, vector<8x128xf32>
    tpu.vector_store %arg6[%c0_21, %c0_22], %59 {strides = array<i32>} : memref<8x128xf32, #tpu.memory_space<vmem>>, vector<8x128xf32>,
    return
  }
}

</mosaic_0001>

<llo_original>
// kernel: tpu_custom_call.1
$region0: #{tpu_custom_call.1}
  #allocation0 [shape = 'u32[]', space=smem, size = 0x4, offset = 0x4, fixed_abs, tag = 'smem constant byte address 0x4 - core index']
  #allocation1 [shape = 'u32[144,128]{1,0:T(1,128)}', space=vmem, size = 0x12000, scoped, tag = 'internal scratch']
  %s0 = inlined_call_operand.vmem [shape: s32[64,1], index: 0, kind: input, shape index: {}]
  %s1 = inlined_call_operand.vmem [shape: bf16[32,32], index: 1, kind: input, shape index: {}]
  %s2 = inlined_call_operand.vmem [shape: bf16[32,32], index: 2, kind: input, shape index: {}]
  %s3 = inlined_call_operand.vmem [shape: f32[1,32], index: 3, kind: input, shape index: {}]
  %s4 = inlined_call_operand.vmem [shape: bf16[32,128], index: 4, kind: input, shape index: {}]
  %s5 = inlined_call_operand.vmem [shape: f32[1,128], index: 5, kind: input, shape index: {}]
  %s6 = inlined_call_operand.hbm [shape: f32[8,128], index: 6, kind: output, shape index: {}]
  %s7 = sld [smem:[#allocation0]]
  $region34: #{tpu_custom_call.1} parent=0
    _
  %s9 = ssub.s32 1, %s7
  %s10 = scalar_select 0, %s9, %s7
  $region1: #{tpu_custom_call.1} parent=0
    #allocation2 [shape = 'u8[4096]{0}', space=vmem, size = 0x1000, scoped, tag = 'output window, operand 0, single buffered']
    #allocation3 [shape = 's32[1]{0}', space=sflag, size = 0x4, scoped, tag = 'scoped memory for tpu_custom_call.1']
    %11 = vsyncpa [#allocation3], 0
    // Predicated region
    $region2: #{tpu_custom_call.1} parent=1 // pred_check
      _
    $region3: #{tpu_custom_call.1} parent=1 // pred_check_branch
      %13 = sbr.rel (0) target = $region5
    $region4: #{tpu_custom_call.1} parent=1 // pred_region
      _
    $region5: #{tpu_custom_call.1} parent=1 // pred_fallthru
      _
    // Predicated region
    $region6: #{tpu_custom_call.1} parent=1 // pred_check
      _
    $region7: #{tpu_custom_call.1} parent=1 // pred_check_branch
      %15 = sbr.rel (0) target = $region9
    $region8: #{tpu_custom_call.1} parent=1 // pred_region
      _
    $region9: #{tpu_custom_call.1} parent=1 // pred_fallthru
      _
    // Predicated region
    $region10: #{tpu_custom_call.1} parent=1 // pred_check
      _
    $region11: #{tpu_custom_call.1} parent=1 // pred_check_branch
      %17 = sbr.rel (0) target = $region13
    $region12: #{tpu_custom_call.1} parent=1 // pred_region
      _
    $region13: #{tpu_custom_call.1} parent=1 // pred_fallthru
      _
    // Predicated region
    $region14: #{tpu_custom_call.1} parent=1 // pred_check
      _
    $region15: #{tpu_custom_call.1} parent=1 // pred_check_branch
      %19 = sbr.rel (0) target = $region17
    $region16: #{tpu_custom_call.1} parent=1 // pred_region
      _
    $region17: #{tpu_custom_call.1} parent=1 // pred_fallthru
      _
    // Predicated region
    $region18: #{tpu_custom_call.1} parent=1 // pred_check
      _
    $region19: #{tpu_custom_call.1} parent=1 // pred_check_branch
      %21 = sbr.rel (0) target = $region21
    $region20: #{tpu_custom_call.1} parent=1 // pred_region
      _
    $region21: #{tpu_custom_call.1} parent=1 // pred_fallthru
      _
    // Predicated region
    $region22: #{tpu_custom_call.1} parent=1 // pred_check
      _
    $region23: #{tpu_custom_call.1} parent=1 // pred_check_branch
      %23 = sbr.rel (0) target = $region25
    $region24: #{tpu_custom_call.1} parent=1 // pred_region
      _
    $region25: #{tpu_custom_call.1} parent=1 // pred_fallthru
      _
    %v25 = vld [vmem:[%s0] sm:$0xff]
    %v26 = vld [vmem:[%s0 + $0x8] sm:$0xff]
    %v27 = vld [vmem:[%s0 + $0x10] sm:$0xff]
    %v28 = vld [vmem:[%s0 + $0x18] sm:$0xff]
    %v29 = vld [vmem:[%s0 + $0x20] sm:$0xff]
    %v30 = vld [vmem:[%s0 + $0x28] sm:$0xff]
    %v31 = vld [vmem:[%s0 + $0x30] sm:$0xff]
    %v32 = vld [vmem:[%s0 + $0x38] sm:$0xff]
    %v33 = vlaneseq
    %v34 = vand.u32 %v33, 127
    %35 = vset.pattern.permute.xlu0 0
    %36 = vperm.xlu0 %35, %v25
    %v37 = vpop.permute.xlu0 %36
    %38 = vset.pattern.permute.xlu0 0
    %39 = vperm.xlu0 %38, %v26
    %v40 = vpop.permute.xlu0 %39
    %41 = vset.pattern.permute.xlu0 0
    %42 = vperm.xlu0 %41, %v27
    %v43 = vpop.permute.xlu0 %42
    %44 = vset.pattern.permute.xlu0 0
    %45 = vperm.xlu0 %44, %v28
    %v46 = vpop.permute.xlu0 %45
    %47 = vset.pattern.permute.xlu0 0
    %48 = vperm.xlu0 %47, %v29
    %v49 = vpop.permute.xlu0 %48
    %50 = vset.pattern.permute.xlu0 0
    %51 = vperm.xlu0 %50, %v30
    %v52 = vpop.permute.xlu0 %51
    %53 = vset.pattern.permute.xlu0 0
    %54 = vperm.xlu0 %53, %v31
    %v55 = vpop.permute.xlu0 %54
    %56 = vset.pattern.permute.xlu0 0
    %57 = vperm.xlu0 %56, %v32
    %v58 = vpop.permute.xlu0 %57
    %vm59 = vcmp.eq.s32.totalorder %v37, %v34
    %vm60 = vcmp.eq.s32.totalorder %v40, %v34
    %vm61 = vcmp.eq.s32.totalorder %v43, %v34
    %vm62 = vcmp.eq.s32.totalorder %v46, %v34
    %vm63 = vcmp.eq.s32.totalorder %v49, %v34
    %vm64 = vcmp.eq.s32.totalorder %v52, %v34
    %vm65 = vcmp.eq.s32.totalorder %v55, %v34
    %vm66 = vcmp.eq.s32.totalorder %v58, %v34
    %v67 = vsel %vm59, 1, 0
    %v68 = vsel %vm60, 1, 0
    %v69 = vsel %vm61, 1, 0
    %v70 = vsel %vm62, 1, 0
    %v71 = vsel %vm63, 1, 0
    %v72 = vsel %vm64, 1, 0
    %v73 = vsel %vm65, 1, 0
    %v74 = vsel %vm66, 1, 0
    %v75 = vcvt.s32.f32 %v67
    %v76 = vcvt.s32.f32 %v68
    %v77 = vcvt.s32.f32 %v69
    %v78 = vcvt.s32.f32 %v70
    %v79 = vcvt.s32.f32 %v71
    %v80 = vcvt.s32.f32 %v72
    %v81 = vcvt.s32.f32 %v73
    %v82 = vcvt.s32.f32 %v74
    %v83 = vpack.c.bf16 %v76, %v75
    %v84 = vpack.c.bf16 %v78, %v77
    %v85 = vpack.c.bf16 %v80, %v79
    %v86 = vpack.c.bf16 %v82, %v81
    %v87 = vld [vmem:[%s1] sm:$0xf]
    %v88 = vld [vmem:[%s1 + $0x4] sm:$0xf]
    %v89 = vld [vmem:[%s1 + $0x8] sm:$0xf]
    %v90 = vld [vmem:[%s1 + $0xc] sm:$0xf]
    %v91 = vld [vmem:[%s3] sm:$0x1]
    %v93 = vlaneseq
    %v94 = vshrl.u32 %v93, 7
    %v95 = vsub.s32 0, %v94
    %v96 = vrot.slane %v91, %v95
    %v102 = vunpack.c.l.b16 %v87
    %v103 = vunpack.c.l.b16 %v88
    %v104 = vunpack.c.l.b16 %v89
    %v105 = vunpack.c.l.b16 %v90
    %v106 = vpack.c.b16 %v103, %v102
    %v107 = vpack.c.b16 %v105, %v104
    %vm110 = vcmask 261120
    %v112 = vsel %vm110, %v83, 0
    %v115 = vsel %vm110, %v84, 0
    %v118 = vsel %vm110, %v85, 0
    %v121 = vsel %vm110, %v86, 0
    %123 = vmatprep.subr.bf16.mxu0 0
    %124 = vmatpush1.bf16.msra.mxu0 %v106
    %125 = vmatprep.subr.bf16.mxu0 0
    %126 = vmatpush1.bf16.msra.mxu0 %v107
    %127 = vmatprep.subr.bf16.mxu0 0
    %128 = vmatpush1.bf16.msra.mxu0 0
    %129 = vmatprep.subr.bf16.mxu0 0
    %130 = vmatpush1.bf16.msra.mxu0 0
    %131 = vmatprep.subr.bf16.mxu0 0
    %132 = vmatpush1.bf16.msra.mxu0 0
    %133 = vmatprep.subr.bf16.mxu0 0
    %134 = vmatpush1.bf16.msra.mxu0 0
    %135 = vmatprep.subr.bf16.mxu0 0
    %136 = vmatpush1.bf16.msra.mxu0 0
    %137 = vmatprep.subr.bf16.mxu0 0
    %138 = vmatpush1.bf16.msra.mxu0 0
    %139 = vmatprep.subr.bf16.mxu0 0
    %140 = vmatpush1.bf16.msra.mxu0 0
    %141 = vmatprep.subr.bf16.mxu0 0
    %142 = vmatpush1.bf16.msra.mxu0 0
    %143 = vmatprep.subr.bf16.mxu0 0
    %144 = vmatpush1.bf16.msra.mxu0 0
    %145 = vmatprep.subr.bf16.mxu0 0
    %146 = vmatpush1.bf16.msra.mxu0 0
    %147 = vmatprep.subr.bf16.mxu0 0
    %148 = vmatpush1.bf16.msra.mxu0 0
    %149 = vmatprep.subr.bf16.mxu0 0
    %150 = vmatpush1.bf16.msra.mxu0 0
    %151 = vmatprep.subr.bf16.mxu0 0
    %152 = vmatpush1.bf16.msra.mxu0 0
    %153 = vmatprep.subr.bf16.mxu0 0
    %154 = vmatpush1.bf16.msra.mxu0 0
    %155 = vmatprep.mubr.bf16.mxu0 0
    %156 = vmatmul.mubr.bf16.gmra.mrb[0].mxu0 %v112
    %v157 = vpop.f32.mrb[0].mxu0
    %v158 = vadd.f32 %v96, %v157
    %v159 = vpop.f32.mrb[0].mxu0
    %v160 = vpop.f32.mrb[0].mxu0
    %v161 = vadd.f32 %v96, %v160
    %v162 = vpop.f32.mrb[0].mxu0
    %163 = vmatprep.mubr.bf16.mxu0 0
    %164 = vmatmul.mubr.bf16.gmra.mrb[0].mxu0 %v115
    %v165 = vpop.f32.mrb[0].mxu0
    %v166 = vadd.f32 %v96, %v165
    %v167 = vpop.f32.mrb[0].mxu0
    %v168 = vpop.f32.mrb[0].mxu0
    %v169 = vadd.f32 %v96, %v168
    %v170 = vpop.f32.mrb[0].mxu0
    %171 = vmatprep.mubr.bf16.mxu0 0
    %172 = vmatmul.mubr.bf16.gmra.mrb[0].mxu0 %v118
    %v173 = vpop.f32.mrb[0].mxu0
    %v174 = vadd.f32 %v96, %v173
    %v175 = vpop.f32.mrb[0].mxu0
    %v176 = vpop.f32.mrb[0].mxu0
    %v177 = vadd.f32 %v96, %v176
    %v178 = vpop.f32.mrb[0].mxu0
    %179 = vmatprep.mubr.bf16.mxu0 0
    %180 = vmatmul.mubr.bf16.gmra.mrb[0].mxu0 %v121
    %v181 = vpop.f32.mrb[0].mxu0
    %v182 = vadd.f32 %v96, %v181
    %v183 = vpop.f32.mrb[0].mxu0
    %v184 = vpop.f32.mrb[0].mxu0
    %v185 = vadd.f32 %v96, %v184
    %v186 = vpop.f32.mrb[0].mxu0
    %187 = vdwg.mxu0
    %v188 = vld [vmem:[%s2] sm:$0xf]
    %v189 = vld [vmem:[%s2 + $0x4] sm:$0xf]
    %v190 = vld [vmem:[%s2 + $0x8] sm:$0xf]
    %v191 = vld [vmem:[%s2 + $0xc] sm:$0xf]
    %v196 = vunpack.c.l.b16 %v188
    %v197 = vunpack.c.l.b16 %v189
    %v198 = vunpack.c.l.b16 %v190
    %v199 = vunpack.c.l.b16 %v191
    %v200 = vpack.c.b16 %v197, %v196
    %v201 = vpack.c.b16 %v199, %v198
    %v205 = vsel %vm110, 0, 0
    %207 = vmatprep.subr.bf16.mxu0 0
    %208 = vmatpush1.bf16.msra.mxu0 %v200
    %209 = vmatprep.subr.bf16.mxu0 0
    %210 = vmatpush1.bf16.msra.mxu0 %v201
    %211 = vmatprep.subr.bf16.mxu0 0
    %212 = vmatpush1.bf16.msra.mxu0 0
    %213 = vmatprep.subr.bf16.mxu0 0
    %214 = vmatpush1.bf16.msra.mxu0 0
    %215 = vmatprep.subr.bf16.mxu0 0
    %216 = vmatpush1.bf16.msra.mxu0 0
    %217 = vmatprep.subr.bf16.mxu0 0
    %218 = vmatpush1.bf16.msra.mxu0 0
    %219 = vmatprep.subr.bf16.mxu0 0
    %220 = vmatpush1.bf16.msra.mxu0 0
    %221 = vmatprep.subr.bf16.mxu0 0
    %222 = vmatpush1.bf16.msra.mxu0 0
    %223 = vmatprep.subr.bf16.mxu0 0
    %224 = vmatpush1.bf16.msra.mxu0 0
    %225 = vmatprep.subr.bf16.mxu0 0
    %226 = vmatpush1.bf16.msra.mxu0 0
    %227 = vmatprep.subr.bf16.mxu0 0
    %228 = vmatpush1.bf16.msra.mxu0 0
    %229 = vmatprep.subr.bf16.mxu0 0
    %230 = vmatpush1.bf16.msra.mxu0 0
    %231 = vmatprep.subr.bf16.mxu0 0
    %232 = vmatpush1.bf16.msra.mxu0 0
    %233 = vmatprep.subr.bf16.mxu0 0
    %234 = vmatpush1.bf16.msra.mxu0 0
    %235 = vmatprep.subr.bf16.mxu0 0
    %236 = vmatpush1.bf16.msra.mxu0 0
    %237 = vmatprep.subr.bf16.mxu0 0
    %238 = vmatpush1.bf16.msra.mxu0 0
    %239 = vmatprep.mubr.bf16.mxu0 0
    %240 = vmatmul.mubr.bf16.gmra.mrb[0].mxu0 %v205
    %v241 = vpop.f32.mrb[0].mxu0
    %v242 = vadd.f32 0.0, %v241
    %v243 = vpop.f32.mrb[0].mxu0
    %v244 = vpop.f32.mrb[0].mxu0
    %v245 = vpop.f32.mrb[0].mxu0
    %246 = vdwg.mxu0
    %v247 = vadd.f32 %v158, %v242
    %v248 = vtanh.pop %v247
    %v249 = vpack.c.bf16 %v248, %v248
    %v251 = vsel %vm110, %v249, 0
    %253 = vmatprep.subr.bf16.mxu0 0
    %254 = vmatpush1.bf16.msra.mxu0 %v200
    %255 = vmatprep.subr.bf16.mxu0 0
    %256 = vmatpush1.bf16.msra.mxu0 %v201
    %257 = vmatprep.subr.bf16.mxu0 0
    %258 = vmatpush1.bf16.msra.mxu0 0
    %259 = vmatprep.subr.bf16.mxu0 0
    %260 = vmatpush1.bf16.msra.mxu0 0
    %261 = vmatprep.subr.bf16.mxu0 0
    %262 = vmatpush1.bf16.msra.mxu0 0
    %263 = vmatprep.subr.bf16.mxu0 0
    %264 = vmatpush1.bf16.msra.mxu0 0
    %265 = vmatprep.subr.bf16.mxu0 0
    %266 = vmatpush1.bf16.msra.mxu0 0
    %267 = vmatprep.subr.bf16.mxu0 0
    %268 = vmatpush1.bf16.msra.mxu0 0
    %269 = vmatprep.subr.bf16.mxu0 0
    %270 = vmatpush1.bf16.msra.mxu0 0
    %271 = vmatprep.subr.bf16.mxu0 0
    %272 = vmatpush1.bf16.msra.mxu0 0
    %273 = vmatprep.subr.bf16.mxu0 0
    %274 = vmatpush1.bf16.msra.mxu0 0
    %275 = vmatprep.subr.bf16.mxu0 0
    %276 = vmatpush1.bf16.msra.mxu0 0
    %277 = vmatprep.subr.bf16.mxu0 0
    %278 = vmatpush1.bf16.msra.mxu0 0
    %279 = vmatprep.subr.bf16.mxu0 0
    %280 = vmatpush1.bf16.msra.mxu0 0
    %281 = vmatprep.subr.bf16.mxu0 0
    %282 = vmatpush1.bf16.msra.mxu0 0
    %283 = vmatprep.subr.bf16.mxu0 0
    %284 = vmatpush1.bf16.msra.mxu0 0
    %285 = vmatprep.mubr.bf16.mxu0 0
    %286 = vmatmul.mubr.bf16.gmra.mrb[0].mxu0 %v251
    %v287 = vpop.f32.mrb[0].mxu0
    %v288 = vadd.f32 0.0, %v287
    %v289 = vpop.f32.mrb[0].mxu0
    %v290 = vpop.f32.mrb[0].mxu0
    %v291 = vpop.f32.mrb[0].mxu0
    %292 = vdwg.mxu0
    %v293 = vadd.f32 %v161, %v288
    %v294 = vtanh.pop %v293
    %v295 = vpack.c.bf16 %v294, %v294
    %v297 = vsel %vm110, %v295, 0
    %299 = vmatprep.subr.bf16.mxu0 0
    %300 = vmatpush1.bf16.msra.mxu0 %v200
    %301 = vmatprep.subr.bf16.mxu0 0
    %302 = vmatpush1.bf16.msra.mxu0 %v201
    %303 = vmatprep.subr.bf16.mxu0 0
    %304 = vmatpush1.bf16.msra.mxu0 0
    %305 = vmatprep.subr.bf16.mxu0 0
    %306 = vmatpush1.bf16.msra.mxu0 0
    %307 = vmatprep.subr.bf16.mxu0 0
    %308 = vmatpush1.bf16.msra.mxu0 0
    %309 = vmatprep.subr.bf16.mxu0 0
    %310 = vmatpush1.bf16.msra.mxu0 0
    %311 = vmatprep.subr.bf16.mxu0 0
    %312 = vmatpush1.bf16.msra.mxu0 0
    %313 = vmatprep.subr.bf16.mxu0 0
    %314 = vmatpush1.bf16.msra.mxu0 0
    %315 = vmatprep.subr.bf16.mxu0 0
    %316 = vmatpush1.bf16.msra.mxu0 0
    %317 = vmatprep.subr.bf16.mxu0 0
    %318 = vmatpush1.bf16.msra.mxu0 0
    %319 = vmatprep.subr.bf16.mxu0 0
    %320 = vmatpush1.bf16.msra.mxu0 0
    %321 = vmatprep.subr.bf16.mxu0 0
    %322 = vmatpush1.bf16.msra.mxu0 0
    %323 = vmatprep.subr.bf16.mxu0 0
    %324 = vmatpush1.bf16.msra.mxu0 0
    %325 = vmatprep.subr.bf16.mxu0 0
    %326 = vmatpush1.bf16.msra.mxu0 0
    %327 = vmatprep.subr.bf16.mxu0 0
    %328 = vmatpush1.bf16.msra.mxu0 0
    %329 = vmatprep.subr.bf16.mxu0 0
    %330 = vmatpush1.bf16.msra.mxu0 0
    %331 = vmatprep.mubr.bf16.mxu0 0
    %332 = vmatmul.mubr.bf16.gmra.mrb[0].mxu0 %v297
    %v333 = vpop.f32.mrb[0].mxu0
    %v334 = vadd.f32 0.0, %v333
    %v335 = vpop.f32.mrb[0].mxu0
    %v336 = vpop.f32.mrb[0].mxu0
    %v337 = vpop.f32.mrb[0].mxu0
    %338 = vdwg.mxu0
    %v339 = vadd.f32 %v166, %v334
    %v340 = vtanh.pop %v339
    %v341 = vpack.c.bf16 %v340, %v340
    %v343 = vsel %vm110, %v341, 0
    %345 = vmatprep.subr.bf16.mxu0 0
    %346 = vmatpush1.bf16.msra.mxu0 %v200
    %347 = vmatprep.subr.bf16.mxu0 0
    %348 = vmatpush1.bf16.msra.mxu0 %v201
    %349 = vmatprep.subr.bf16.mxu0 0
    %350 = vmatpush1.bf16.msra.mxu0 0
    %351 = vmatprep.subr.bf16.mxu0 0
    %352 = vmatpush1.bf16.msra.mxu0 0
    %353 = vmatprep.subr.bf16.mxu0 0
    %354 = vmatpush1.bf16.msra.mxu0 0
    %355 = vmatprep.subr.bf16.mxu0 0
    %356 = vmatpush1.bf16.msra.mxu0 0
    %357 = vmatprep.subr.bf16.mxu0 0
    %358 = vmatpush1.bf16.msra.mxu0 0
    %359 = vmatprep.subr.bf16.mxu0 0
    %360 = vmatpush1.bf16.msra.mxu0 0
    %361 = vmatprep.subr.bf16.mxu0 0
    %362 = vmatpush1.bf16.msra.mxu0 0
    %363 = vmatprep.subr.bf16.mxu0 0
    %364 = vmatpush1.bf16.msra.mxu0 0
    %365 = vmatprep.subr.bf16.mxu0 0
    %366 = vmatpush1.bf16.msra.mxu0 0
    %367 = vmatprep.subr.bf16.mxu0 0
    %368 = vmatpush1.bf16.msra.mxu0 0
    %369 = vmatprep.subr.bf16.mxu0 0
    %370 = vmatpush1.bf16.msra.mxu0 0
    %371 = vmatprep.subr.bf16.mxu0 0
    %372 = vmatpush1.bf16.msra.mxu0 0
    %373 = vmatprep.subr.bf16.mxu0 0
    %374 = vmatpush1.bf16.msra.mxu0 0
    %375 = vmatprep.subr.bf16.mxu0 0
    %376 = vmatpush1.bf16.msra.mxu0 0
    %377 = vmatprep.mubr.bf16.mxu0 0
    %378 = vmatmul.mubr.bf16.gmra.mrb[0].mxu0 %v343
    %v379 = vpop.f32.mrb[0].mxu0
    %v380 = vadd.f32 0.0, %v379
    %v381 = vpop.f32.mrb[0].mxu0
    %v382 = vpop.f32.mrb[0].mxu0
    %v383 = vpop.f32.mrb[0].mxu0
    %384 = vdwg.mxu0
    %v385 = vadd.f32 %v169, %v380
    %v386 = vtanh.pop %v385
    %v387 = vpack.c.bf16 %v386, %v386
    %v389 = vsel %vm110, %v387, 0
    %391 = vmatprep.subr.bf16.mxu0 0
    %392 = vmatpush1.bf16.msra.mxu0 %v200
    %393 = vmatprep.subr.bf16.mxu0 0
    %394 = vmatpush1.bf16.msra.mxu0 %v201
    %395 = vmatprep.subr.bf16.mxu0 0
    %396 = vmatpush1.bf16.msra.mxu0 0
    %397 = vmatprep.subr.bf16.mxu0 0
    %398 = vmatpush1.bf16.msra.mxu0 0
    %399 = vmatprep.subr.bf16.mxu0 0
    %400 = vmatpush1.bf16.msra.mxu0 0
    %401 = vmatprep.subr.bf16.mxu0 0
    %402 = vmatpush1.bf16.msra.mxu0 0
    %403 = vmatprep.subr.bf16.mxu0 0
    %404 = vmatpush1.bf16.msra.mxu0 0
    %405 = vmatprep.subr.bf16.mxu0 0
    %406 = vmatpush1.bf16.msra.mxu0 0
    %407 = vmatprep.subr.bf16.mxu0 0
    %408 = vmatpush1.bf16.msra.mxu0 0
    %409 = vmatprep.subr.bf16.mxu0 0
    %410 = vmatpush1.bf16.msra.mxu0 0
    %411 = vmatprep.subr.bf16.mxu0 0
    %412 = vmatpush1.bf16.msra.mxu0 0
    %413 = vmatprep.subr.bf16.mxu0 0
    %414 = vmatpush1.bf16.msra.mxu0 0
    %415 = vmatprep.subr.bf16.mxu0 0
    %416 = vmatpush1.bf16.msra.mxu0 0
    %417 = vmatprep.subr.bf16.mxu0 0
    %418 = vmatpush1.bf16.msra.mxu0 0
    %419 = vmatprep.subr.bf16.mxu0 0
    %420 = vmatpush1.bf16.msra.mxu0 0
    %421 = vmatprep.subr.bf16.mxu0 0
    %422 = vmatpush1.bf16.msra.mxu0 0
    %423 = vmatprep.mubr.bf16.mxu0 0
    %424 = vmatmul.mubr.bf16.gmra.mrb[0].mxu0 %v389
    %v425 = vpop.f32.mrb[0].mxu0
    %v426 = vadd.f32 0.0, %v425
    %v427 = vpop.f32.mrb[0].mxu0
    %v428 = vpop.f32.mrb[0].mxu0
    %v429 = vpop.f32.mrb[0].mxu0
    %430 = vdwg.mxu0
    %v431 = vadd.f32 %v174, %v426
    %v432 = vtanh.pop %v431
    %v433 = vpack.c.bf16 %v432, %v432
    %v435 = vsel %vm110, %v433, 0
    %437 = vmatprep.subr.bf16.mxu0 0
    %438 = vmatpush1.bf16.msra.mxu0 %v200
    %439 = vmatprep.subr.bf16.mxu0 0
    %440 = vmatpush1.bf16.msra.mxu0 %v201
    %441 = vmatprep.subr.bf16.mxu0 0
    %442 = vmatpush1.bf16.msra.mxu0 0
    %443 = vmatprep.subr.bf16.mxu0 0
    %444 = vmatpush1.bf16.msra.mxu0 0
    %445 = vmatprep.subr.bf16.mxu0 0
    %446 = vmatpush1.bf16.msra.mxu0 0
    %447 = vmatprep.subr.bf16.mxu0 0
    %448 = vmatpush1.bf16.msra.mxu0 0
    %449 = vmatprep.subr.bf16.mxu0 0
    %450 = vmatpush1.bf16.msra.mxu0 0
    %451 = vmatprep.subr.bf16.mxu0 0
    %452 = vmatpush1.bf16.msra.mxu0 0
    %453 = vmatprep.subr.bf16.mxu0 0
    %454 = vmatpush1.bf16.msra.mxu0 0
    %455 = vmatprep.subr.bf16.mxu0 0
    %456 = vmatpush1.bf16.msra.mxu0 0
    %457 = vmatprep.subr.bf16.mxu0 0
    %458 = vmatpush1.bf16.msra.mxu0 0
    %459 = vmatprep.subr.bf16.mxu0 0
    %460 = vmatpush1.bf16.msra.mxu0 0
    %461 = vmatprep.subr.bf16.mxu0 0
    %462 = vmatpush1.bf16.msra.mxu0 0
    %463 = vmatprep.subr.bf16.mxu0 0
    %464 = vmatpush1.bf16.msra.mxu0 0
    %465 = vmatprep.subr.bf16.mxu0 0
    %466 = vmatpush1.bf16.msra.mxu0 0
    %467 = vmatprep.subr.bf16.mxu0 0
    %468 = vmatpush1.bf16.msra.mxu0 0
    %469 = vmatprep.mubr.bf16.mxu0 0
    %470 = vmatmul.mubr.bf16.gmra.mrb[0].mxu0 %v435
    %v471 = vpop.f32.mrb[0].mxu0
    %v472 = vadd.f32 0.0, %v471
    %v473 = vpop.f32.mrb[0].mxu0
    %v474 = vpop.f32.mrb[0].mxu0
    %v475 = vpop.f32.mrb[0].mxu0
    %476 = vdwg.mxu0
    %v477 = vadd.f32 %v177, %v472
    %v478 = vtanh.pop %v477
    %v479 = vpack.c.bf16 %v478, %v478
    %v481 = vsel %vm110, %v479, 0
    %483 = vmatprep.subr.bf16.mxu0 0
    %484 = vmatpush1.bf16.msra.mxu0 %v200
    %485 = vmatprep.subr.bf16.mxu0 0
    %486 = vmatpush1.bf16.msra.mxu0 %v201
    %487 = vmatprep.subr.bf16.mxu0 0
    %488 = vmatpush1.bf16.msra.mxu0 0
    %489 = vmatprep.subr.bf16.mxu0 0
    %490 = vmatpush1.bf16.msra.mxu0 0
    %491 = vmatprep.subr.bf16.mxu0 0
    %492 = vmatpush1.bf16.msra.mxu0 0
    %493 = vmatprep.subr.bf16.mxu0 0
    %494 = vmatpush1.bf16.msra.mxu0 0
    %495 = vmatprep.subr.bf16.mxu0 0
    %496 = vmatpush1.bf16.msra.mxu0 0
    %497 = vmatprep.subr.bf16.mxu0 0
    %498 = vmatpush1.bf16.msra.mxu0 0
    %499 = vmatprep.subr.bf16.mxu0 0
    %500 = vmatpush1.bf16.msra.mxu0 0
    %501 = vmatprep.subr.bf16.mxu0 0
    %502 = vmatpush1.bf16.msra.mxu0 0
    %503 = vmatprep.subr.bf16.mxu0 0
    %504 = vmatpush1.bf16.msra.mxu0 0
    %505 = vmatprep.subr.bf16.mxu0 0
    %506 = vmatpush1.bf16.msra.mxu0 0
    %507 = vmatprep.subr.bf16.mxu0 0
    %508 = vmatpush1.bf16.msra.mxu0 0
    %509 = vmatprep.subr.bf16.mxu0 0
    %510 = vmatpush1.bf16.msra.mxu0 0
    %511 = vmatprep.subr.bf16.mxu0 0
    %512 = vmatpush1.bf16.msra.mxu0 0
    %513 = vmatprep.subr.bf16.mxu0 0
    %514 = vmatpush1.bf16.msra.mxu0 0
    %515 = vmatprep.mubr.bf16.mxu0 0
    %516 = vmatmul.mubr.bf16.gmra.mrb[0].mxu0 %v481
    %v517 = vpop.f32.mrb[0].mxu0
    %v518 = vadd.f32 0.0, %v517
    %v519 = vpop.f32.mrb[0].mxu0
    %v520 = vpop.f32.mrb[0].mxu0
    %v521 = vpop.f32.mrb[0].mxu0
    %522 = vdwg.mxu0
    %v523 = vadd.f32 %v182, %v518
    %v524 = vtanh.pop %v523
    %v525 = vpack.c.bf16 %v524, %v524
    %v527 = vsel %vm110, %v525, 0
    %529 = vmatprep.subr.bf16.mxu0 0
    %530 = vmatpush1.bf16.msra.mxu0 %v200
    %531 = vmatprep.subr.bf16.mxu0 0
    %532 = vmatpush1.bf16.msra.mxu0 %v201
    %533 = vmatprep.subr.bf16.mxu0 0
    %534 = vmatpush1.bf16.msra.mxu0 0
    %535 = vmatprep.subr.bf16.mxu0 0
    %536 = vmatpush1.bf16.msra.mxu0 0
    %537 = vmatprep.subr.bf16.mxu0 0
    %538 = vmatpush1.bf16.msra.mxu0 0
    %539 = vmatprep.subr.bf16.mxu0 0
    %540 = vmatpush1.bf16.msra.mxu0 0
    %541 = vmatprep.subr.bf16.mxu0 0
    %542 = vmatpush1.bf16.msra.mxu0 0
    %543 = vmatprep.subr.bf16.mxu0 0
    %544 = vmatpush1.bf16.msra.mxu0 0
    %545 = vmatprep.subr.bf16.mxu0 0
    %546 = vmatpush1.bf16.msra.mxu0 0
    %547 = vmatprep.subr.bf16.mxu0 0
    %548 = vmatpush1.bf16.msra.mxu0 0
    %549 = vmatprep.subr.bf16.mxu0 0
    %550 = vmatpush1.bf16.msra.mxu0 0
    %551 = vmatprep.subr.bf16.mxu0 0
    %552 = vmatpush1.bf16.msra.mxu0 0
    %553 = vmatprep.subr.bf16.mxu0 0
    %554 = vmatpush1.bf16.msra.mxu0 0
    %555 = vmatprep.subr.bf16.mxu0 0
    %556 = vmatpush1.bf16.msra.mxu0 0
    %557 = vmatprep.subr.bf16.mxu0 0
    %558 = vmatpush1.bf16.msra.mxu0 0
    %559 = vmatprep.subr.bf16.mxu0 0
    %560 = vmatpush1.bf16.msra.mxu0 0
    %561 = vmatprep.mubr.bf16.mxu0 0
    %562 = vmatmul.mubr.bf16.gmra.mrb[0].mxu0 %v527
    %v563 = vpop.f32.mrb[0].mxu0
    %v564 = vadd.f32 0.0, %v563
    %v565 = vpop.f32.mrb[0].mxu0
    %v566 = vpop.f32.mrb[0].mxu0
    %v567 = vpop.f32.mrb[0].mxu0
    %568 = vdwg.mxu0
    %v569 = vadd.f32 %v185, %v564
    %v570 = vtanh.pop %v569
    %v571 = vpack.c.bf16 %v570, %v570
    %v572 = vld [vmem:[%s4] sm:$0xf]
    %v573 = vld [vmem:[%s4 + $0x4] sm:$0xf]
    %v574 = vld [vmem:[%s4 + $0x8] sm:$0xf]
    %v575 = vld [vmem:[%s4 + $0xc] sm:$0xf]
    %v576 = vld [vmem:[%s5] sm:$0x1]
    %v578 = vlaneseq
    %v579 = vshrl.u32 %v578, 7
    %v580 = vsub.s32 0, %v579
    %v581 = vrot.slane %v576, %v580
    %v587 = vunpack.c.l.b16 %v572
    %v588 = vunpack.c.l.b16 %v573
    %v589 = vunpack.c.l.b16 %v574
    %v590 = vunpack.c.l.b16 %v575
    %v591 = vpack.c.b16 %v588, %v587
    %v592 = vpack.c.b16 %v590, %v589
    %v596 = vsel %vm110, %v571, 0
    %598 = vmatprep.subr.bf16.mxu0 0
    %599 = vmatpush1.bf16.msra.mxu0 %v591
    %600 = vmatprep.subr.bf16.mxu0 0
    %601 = vmatpush1.bf16.msra.mxu0 %v592
    %602 = vmatprep.subr.bf16.mxu0 0
    %603 = vmatpush1.bf16.msra.mxu0 0
    %604 = vmatprep.subr.bf16.mxu0 0
    %605 = vmatpush1.bf16.msra.mxu0 0
    %606 = vmatprep.subr.bf16.mxu0 0
    %607 = vmatpush1.bf16.msra.mxu0 0
    %608 = vmatprep.subr.bf16.mxu0 0
    %609 = vmatpush1.bf16.msra.mxu0 0
    %610 = vmatprep.subr.bf16.mxu0 0
    %611 = vmatpush1.bf16.msra.mxu0 0
    %612 = vmatprep.subr.bf16.mxu0 0
    %613 = vmatpush1.bf16.msra.mxu0 0
    %614 = vmatprep.subr.bf16.mxu0 0
    %615 = vmatpush1.bf16.msra.mxu0 0
    %616 = vmatprep.subr.bf16.mxu0 0
    %617 = vmatpush1.bf16.msra.mxu0 0
    %618 = vmatprep.subr.bf16.mxu0 0
    %619 = vmatpush1.bf16.msra.mxu0 0
    %620 = vmatprep.subr.bf16.mxu0 0
    %621 = vmatpush1.bf16.msra.mxu0 0
    %622 = vmatprep.subr.bf16.mxu0 0
    %623 = vmatpush1.bf16.msra.mxu0 0
    %624 = vmatprep.subr.bf16.mxu0 0
    %625 = vmatpush1.bf16.msra.mxu0 0
    %626 = vmatprep.subr.bf16.mxu0 0
    %627 = vmatpush1.bf16.msra.mxu0 0
    %628 = vmatprep.subr.bf16.mxu0 0
    %629 = vmatpush1.bf16.msra.mxu0 0
    %630 = vmatprep.mubr.bf16.mxu0 0
    %631 = vmatmul.mubr.bf16.gmra.mrb[0].mxu0 %v596
    %v632 = vpop.f32.mrb[0].mxu0
    %v633 = vadd.f32 %v581, %v632
    %v634 = vpop.f32.mrb[0].mxu0
    %v635 = vpop.f32.mrb[0].mxu0
    %v636 = vpop.f32.mrb[0].mxu0
    %637 = vdwg.mxu0
    %638 = vst [vmem:[#allocation2] sm:$0xff] %v633
    // Predicated region
    $region26: #{tpu_custom_call.1} parent=1 // pred_check
      _
    $region27: #{tpu_custom_call.1} parent=1 // pred_check_branch
      %640 = sbr.rel (0) target = $region29
    $region28: #{tpu_custom_call.1} parent=1 // pred_region
      %s642 = ssub.s32 128, 128
      %643 = vsyncadd [#allocation3], %s642
      %s645 = sshll.u32 [#allocation2], 4
      %s646 = int_to_ptr.vmem [resolvable:$true] %s645
      %648 = dma.vmem_to_hbm [thread:$0]  %s646, 128, %s6, [#allocation3]
    $region29: #{tpu_custom_call.1} parent=1 // pred_fallthru
      _
    // Predicated region
    $region30: #{tpu_custom_call.1} parent=1 // pred_check
      _
    $region31: #{tpu_custom_call.1} parent=1 // pred_check_branch
      %650 = sbr.rel (0) target = $region33
    $region32: #{tpu_custom_call.1} parent=1 // pred_region
      %651 = dma.done [#allocation3], 128
    $region33: #{tpu_custom_call.1} parent=1 // pred_fallthru
      _
    %652 = vsyncpa [#allocation3], 1

</llo_original>
